<compile_context>
chip_gen: v5e
topology: v5e:2x2
jax: 0.10.0
libtpu: 0.0.40
codegen_flags: <defaults>
</compile_context>

<pallas_src>
import functools

import jax
import jax.numpy as jnp
from jax.experimental import pallas as pl
from jax.experimental.pallas import tpu as pltpu

_LANES = 128
_SUBLANES = 8


def _bce_kernel(p_ref, y_ref, out_ref, *, tile_rows, steps, rows, need_mask,
                hard_labels):
    c = pl.program_id(0)   # core split ("parallel": one per TensorCore on v7x)
    i = pl.program_id(1)   # reduction step ("arbitrary": resident accumulator)

    # Zero this split's resident (8, 128) accumulator (== the output block) once.
    @pl.when(i == 0)
    def _init():
        out_ref[...] = jnp.zeros_like(out_ref)

    p = p_ref[...].astype(jnp.float32)
    y = y_ref[...]

    if hard_labels:
        # Strictly-0/1 targets: one transcendental per element (EUP relief on v7x).
        # log1p(p - 1) == log(p) and log1p(-p) == log(1 - p), so this matches the
        # soft path / PyTorch's log1p behaviour near p ~ 1.  (Only for y == 1 and
        # p < ~2^-24 does the -100 clamp kick in marginally early.)
        if jnp.issubdtype(y.dtype, jnp.floating):
            y_pos = y >= 0.5
        else:
            y_pos = y > 0
        arg = jnp.where(y_pos, p - 1.0, -p)
        loss = -jnp.maximum(jnp.log1p(arg), -100.0)
    else:
        # General (soft-target capable) clamped-log BCE, exact PyTorch parity.
        yf = y.astype(jnp.float32)
        log_p = jnp.maximum(jnp.log(p), -100.0)
        log_1mp = jnp.maximum(jnp.log1p(-p), -100.0)
        loss = -(yf * log_p + (1.0 - yf) * log_1mp)

    if need_mask:
        # Ragged final block / clamped extra grid steps: zero rows past the end.
        b = c * steps + i                                       # logical block index
        ridx = jax.lax.broadcasted_iota(jnp.int32, (tile_rows, _LANES), 0)
        loss = jnp.where(b * tile_rows + ridx < rows, loss, 0.0)

    if tile_rows % _SUBLANES == 0:
        # VPU-only fold of this tile onto the (8, 128) accumulator output.
        out_ref[...] += jnp.sum(
            loss.reshape(tile_rows // _SUBLANES, _SUBLANES, _LANES), axis=0)
    else:
        # Single-block path where rows is not a multiple of 8 (tile_rows == rows).
        out_ref[0:1, :] += jnp.sum(loss, axis=0, keepdims=True)


def phrase_grounding_loss(attn_map: jax.Array, phrase_mask: jax.Array, *,
                          max_tile_rows: int = 4096,
                          hard_labels: bool | None = None,
                          num_splits: int = 2) -> jax.Array:
    """Mean binary cross-entropy over [B, L] (any-shape) inputs, computed in Pallas."""
    assert attn_map.shape == phrase_mask.shape, (attn_map.shape, phrase_mask.shape)
    n = int(attn_map.size)
    assert n > 0

    if hard_labels is None:
        # Bool / integer masks are guaranteed hard {0, 1} targets.
        hard_labels = bool(phrase_mask.dtype == jnp.bool_
                           or jnp.issubdtype(phrase_mask.dtype, jnp.integer))

    p = attn_map.reshape(-1)
    y = phrase_mask.reshape(-1)

    # Lane-dense (rows, 128) view.  Free reshape when n % 128 == 0; otherwise pad the
    # flat tail up to one lane row (zero padding contributes exactly zero loss).
    rows = -(-n // _LANES)
    n_lanes = rows * _LANES
    if n_lanes != n:
        p = jnp.pad(p, (0, n_lanes - n))
        y = jnp.pad(y, (0, n_lanes - n))
    p2 = p.reshape(rows, _LANES)
    y2 = y.reshape(rows, _LANES)

    # Tiling: one full-extent block when everything fits in a single tile, otherwise
    # 32-row-aligned tiles (clean sublane packing for f32 / bf16 / int8 inputs) with
    # in-kernel masking of the ragged final block -- no padded input copies.
    max_tile_rows = max(32, (int(max_tile_rows) // 32) * 32)
    if rows <= max_tile_rows:
        tile_rows, total_blocks = rows, 1
    else:
        tile_rows = max_tile_rows
        total_blocks = -(-rows // tile_rows)
    splits = num_splits if total_blocks >= num_splits else 1
    steps = -(-total_blocks // splits)
    need_mask = (splits * steps * tile_rows) != rows
    last_block = total_blocks - 1

    def in_index_map(c, i):
        # Clamp grid steps that run past the last block back onto it; the kernel masks
        # their rows to zero, so only in-bounds blocks are ever the DMA target.
        return (jnp.minimum(c * steps + i, last_block), 0)

    kernel = functools.partial(
        _bce_kernel, tile_rows=tile_rows, steps=steps, rows=rows,
        need_mask=need_mask, hard_labels=hard_labels)

    partials = pl.pallas_call(
        kernel,
        out_shape=jax.ShapeDtypeStruct((splits, _SUBLANES, _LANES), jnp.float32),
        grid_spec=pltpu.PrefetchScalarGridSpec(
            num_scalar_prefetch=0,
            grid=(splits, steps),
            in_specs=[
                pl.BlockSpec((tile_rows, _LANES), in_index_map),
                pl.BlockSpec((tile_rows, _LANES), in_index_map),
            ],
            # The per-split (8, 128) partial sums ARE the output (lane-dense store);
            # no in-kernel cross-lane reduce, no 1-lane masked store.
            out_specs=pl.BlockSpec((None, _SUBLANES, _LANES), lambda c, i: (c, 0, 0)),
        ),
        compiler_params=pltpu.CompilerParams(
            # Leading axis parallel -> both TensorCores on v7x; trailing axis is the
            # reduction over row tiles with a resident accumulator.
            dimension_semantics=("parallel", "arbitrary"),
            vmem_limit_bytes=32 * 1024 * 1024,
        ),
        cost_estimate=pl.CostEstimate(
            flops=5 * n,
            transcendentals=(1 if hard_labels else 2) * n,
            bytes_accessed=n * (p2.dtype.itemsize + y2.dtype.itemsize)
            + splits * _SUBLANES * _LANES * 4,
        ),
    )(p2, y2)

    # Tiny final reduction + mean scale in plain JAX.
    return jnp.sum(partials) * (1.0 / n)


def _bce_ref(p, y):
    log_p = jnp.maximum(jnp.log(p), -100.0)
    log_1mp = jnp.maximum(jnp.log1p(-p), -100.0)
    return jnp.mean(-(y * log_p + (1.0 - y) * log_1mp))


if __name__ == "__main__":
    key = jax.random.PRNGKey(0)
    k1, k2, k3, k4, k5, k6 = jax.random.split(key, 6)

    # Main case matching the PyTorch spec: [B, L] attention weights + float mask.
    B, L = 2, 8
    attn_map = jax.nn.sigmoid(jax.random.normal(k1, (B, L), dtype=jnp.float32))
    phrase_mask = (jax.random.uniform(k2, (B, L)) > 0.5).astype(jnp.float32)
    loss = phrase_grounding_loss(attn_map, phrase_mask)
    jax.block_until_ready(loss)
    ref = _bce_ref(attn_map, phrase_mask)
    assert jnp.allclose(loss, ref, rtol=1e-5, atol=1e-5), (loss, ref)

    # Reduced-bandwidth mask stream: int8 targets -> hard-label (single-log) path.
    B2, L2 = 4, 1024
    attn2 = jax.nn.sigmoid(jax.random.normal(k3, (B2, L2), dtype=jnp.float32))
    mask2_i8 = (jax.random.uniform(k4, (B2, L2)) > 0.5).astype(jnp.int8)
    loss2 = phrase_grounding_loss(attn2, mask2_i8)
    jax.block_until_ready(loss2)
    ref2 = _bce_ref(attn2, mask2_i8.astype(jnp.float32))
    assert jnp.allclose(loss2, ref2, rtol=1e-5, atol=1e-5), (loss2, ref2)

    # Multi-block grid: exercises both splits, resident accumulators and the in-kernel
    # masking of the ragged final block (125 rows with 32-row tiles), with no jnp.pad.
    B3, L3 = 2, 8000
    attn3 = jax.nn.sigmoid(jax.random.normal(k5, (B3, L3), dtype=jnp.float32))
    mask3 = (jax.random.uniform(k6, (B3, L3)) > 0.5).astype(jnp.float32)
    loss3 = phrase_grounding_loss(attn3, mask3, max_tile_rows=32)
    jax.block_until_ready(loss3)
    ref3 = _bce_ref(attn3, mask3)
    assert jnp.allclose(loss3, ref3, rtol=1e-5, atol=1e-5), (loss3, ref3)

    print("KERNEL_OK")
</pallas_src>

<mosaic_0001>
module attributes {stable_mosaic.version = 11 : i64} {
  func.func @_bce_kernel(%arg0: i32, %arg1: i32, %arg2: memref<1x128xf32, #tpu.memory_space<vmem>>, %arg3: memref<1x128xf32, #tpu.memory_space<vmem>>, %arg4: memref<1x8x128xf32, #tpu.memory_space<vmem>>) attributes {dimension_semantics = [#tpu.dimension_semantics<parallel>, #tpu.dimension_semantics<arbitrary>], iteration_bounds = array<i64: 1, 1>, scalar_prefetch = 0 : i64, scratch_operands = 0 : i64, tpu.core_type = #tpu.core_type<tc>, window_params = [{transform_indices = @transform_0, window_bounds = array<i64: 1, 128>}, {transform_indices = @transform_1, window_bounds = array<i64: 1, 128>}, {transform_indices = @transform_2, window_bounds = array<i64: 1, 8, 128>}]} {
    %c0_i32 = arith.constant 0 : i32
    %0 = arith.cmpi eq, %arg1, %c0_i32 : i32
    %1 = arith.extui %0 : i1 to i32
    %c0_i32_0 = arith.constant 0 : i32
    %2 = arith.cmpi ne, %1, %c0_i32_0 : i32
    scf.if %2 {
      %cst_15 = arith.constant 0.000000e+00 : f32
      %28 = vector.broadcast %cst_15 : f32 to vector<8x128xf32>
      %c0_16 = arith.constant 0 : index
      %c0_17 = arith.constant 0 : index
      %c0_18 = arith.constant 0 : index
      %29 = vector.load %arg4[%c0_16, %c0_17, %c0_18] : memref<1x8x128xf32, #tpu.memory_space<vmem>>, vector<1x8x128xf32>
      %30 = vector.shape_cast %29 : vector<1x8x128xf32> to vector<8x128xf32>
      %31 = vector.shape_cast %28 : vector<8x128xf32> to vector<1x8x128xf32>
      tpu.vector_store %arg4[%c0_16, %c0_17, %c0_18], %31 {strides = array<i32>} : memref<1x8x128xf32, #tpu.memory_space<vmem>>, vector<1x8x128xf32>,
    } else {
    }
    %c0 = arith.constant 0 : index
    %c0_1 = arith.constant 0 : index
    %3 = vector.load %arg2[%c0, %c0_1] : memref<1x128xf32, #tpu.memory_space<vmem>>, vector<1x128xf32>
    %c0_2 = arith.constant 0 : index
    %c0_3 = arith.constant 0 : index
    %4 = vector.load %arg3[%c0_2, %c0_3] : memref<1x128xf32, #tpu.memory_space<vmem>>, vector<1x128xf32>
    %5 = math.log %3 : vector<1x128xf32>
    %cst = arith.constant -1.000000e+02 : f32
    %6 = vector.broadcast %cst : f32 to vector<1x128xf32>
    %7 = arith.maximumf %5, %6 : vector<1x128xf32>
    %cst_4 = arith.constant 0.000000e+00 : f32
    %8 = vector.broadcast %cst_4 : f32 to vector<1x128xf32>
    %9 = arith.subf %8, %3 : vector<1x128xf32>
    %10 = math.log1p %9 : vector<1x128xf32>
    %cst_5 = arith.constant -1.000000e+02 : f32
    %11 = vector.broadcast %cst_5 : f32 to vector<1x128xf32>
    %12 = arith.maximumf %10, %11 : vector<1x128xf32>
    %13 = arith.mulf %4, %7 : vector<1x128xf32>
    %cst_6 = arith.constant 1.000000e+00 : f32
    %14 = vector.broadcast %cst_6 : f32 to vector<1x128xf32>
    %15 = arith.subf %14, %4 : vector<1x128xf32>
    %16 = arith.mulf %15, %12 : vector<1x128xf32>
    %17 = arith.addf %13, %16 : vector<1x128xf32>
    %cst_7 = arith.constant 0.000000e+00 : f32
    %18 = vector.broadcast %cst_7 : f32 to vector<1x128xf32>
    %19 = arith.subf %18, %17 : vector<1x128xf32>
    %c0_8 = arith.constant 0 : index
    %c0_9 = arith.constant 0 : index
    %c0_10 = arith.constant 0 : index
    %20 = vector.load %arg4[%c0_8, %c0_9, %c0_10] : memref<1x8x128xf32, #tpu.memory_space<vmem>>, vector<1x1x128xf32>
    %21 = vector.shape_cast %20 : vector<1x1x128xf32> to vector<1x128xf32>
    %cst_11 = arith.constant dense<0.000000e+00> : vector<128xf32>
    %22 = vector.multi_reduction <add>, %19, %cst_11 [0] : vector<1x128xf32> to vector<128xf32>
    %23 = vector.shape_cast %22 : vector<128xf32> to vector<1x128xf32>
    %24 = arith.addf %21, %23 : vector<1x128xf32>
    %c0_12 = arith.constant 0 : index
    %c0_13 = arith.constant 0 : index
    %c0_14 = arith.constant 0 : index
    %25 = vector.load %arg4[%c0_12, %c0_13, %c0_14] : memref<1x8x128xf32, #tpu.memory_space<vmem>>, vector<1x1x128xf32>
    %26 = vector.shape_cast %25 : vector<1x1x128xf32> to vector<1x128xf32>
    %27 = vector.shape_cast %24 : vector<1x128xf32> to vector<1x1x128xf32>
    tpu.vector_store %arg4[%c0_12, %c0_13, %c0_14], %27 {strides = array<i32>} : memref<1x8x128xf32, #tpu.memory_space<vmem>>, vector<1x1x128xf32>,
    return
  }
  func.func @transform_0(%arg0: i32, %arg1: i32) -> (i32, i32) {
    %c1_i32 = arith.constant 1 : i32
    %0 = arith.muli %arg0, %c1_i32 : i32
    %1 = arith.addi %0, %arg1 : i32
    %c0_i32 = arith.constant 0 : i32
    %2 = arith.minsi %1, %c0_i32 : i32
    %c0_i32_0 = arith.constant 0 : i32
    %c0_i32_1 = arith.constant 0 : i32
    return %2, %c0_i32_0 : i32, i32
  }
  func.func @transform_1(%arg0: i32, %arg1: i32) -> (i32, i32) {
    %c1_i32 = arith.constant 1 : i32
    %0 = arith.muli %arg0, %c1_i32 : i32
    %1 = arith.addi %0, %arg1 : i32
    %c0_i32 = arith.constant 0 : i32
    %2 = arith.minsi %1, %c0_i32 : i32
    %c0_i32_0 = arith.constant 0 : i32
    %c0_i32_1 = arith.constant 0 : i32
    return %2, %c0_i32_0 : i32, i32
  }
  func.func @transform_2(%arg0: i32, %arg1: i32) -> (i32, i32, i32) {
    %c0_i32 = arith.constant 0 : i32
    %c0_i32_0 = arith.constant 0 : i32
    %c0_i32_1 = arith.constant 0 : i32
    return %arg0, %c0_i32, %c0_i32_0 : i32, i32, i32
  }
}

</mosaic_0001>

<llo_original>
// kernel: tpu_custom_call.1
$region0: #{tpu_custom_call.1}
  #allocation0 [shape = 'u32[]', space=smem, size = 0x4, offset = 0x4, fixed_abs, tag = 'smem constant byte address 0x4 - core index']
  #allocation1 [shape = 'u32[72,128]{1,0:T(1,128)}', space=vmem, size = 0x9000, scoped, tag = 'internal scratch']
  %s0 = inlined_call_operand.hbm [shape: f32[1,128], index: 0, kind: input, shape index: {}]
  %s1 = inlined_call_operand.hbm [shape: f32[1,128], index: 1, kind: input, shape index: {}]
  %s2 = inlined_call_operand.hbm [shape: f32[1,8,128], index: 2, kind: output, shape index: {}]
  %s3 = sld [smem:[#allocation0]]
  $region30: #{tpu_custom_call.1} parent=0
    _
  %s5 = ssub.s32 1, %s3
  %s6 = scalar_select 0, %s5, %s3
  $region1: #{tpu_custom_call.1} parent=0
    #allocation2 [shape = 'u8[512]{0}', space=vmem, size = 0x400, scoped, tag = 'input window, operand 0, single buffered']
    #allocation3 [shape = 's32[1]{0}', space=sflag, size = 0x4, scoped, tag = 'scoped memory for tpu_custom_call.1']
    #allocation4 [shape = 's32[1]{0}', space=sflag, size = 0x4, scoped, tag = 'scoped memory for tpu_custom_call.1']
    #allocation5 [shape = 'u8[512]{0}', space=vmem, size = 0x400, scoped, tag = 'input window, operand 1, single buffered']
    #allocation6 [shape = 's32[1]{0}', space=sflag, size = 0x4, scoped, tag = 'scoped memory for tpu_custom_call.1']
    #allocation7 [shape = 'u8[4096]{0}', space=vmem, size = 0x1000, scoped, tag = 'output window, operand 0, single buffered']
    %7 = vsyncpa [#allocation3], 0
    %8 = vsyncpa [#allocation6], 0
    %9 = vsyncpa [#allocation4], 0
    // Predicated region
    $region2: #{tpu_custom_call.1} parent=1 // pred_check
      _
    $region3: #{tpu_custom_call.1} parent=1 // pred_check_branch
      %11 = sbr.rel (0) target = $region5
    $region4: #{tpu_custom_call.1} parent=1 // pred_region
      %s12 = sadd.s32 0, 0
      %p13 = scmp.lt.s32.totalorder %s12, 0
      %s14 = scalar_select %p13, %s12, 0
      %16 = vsyncadd [#allocation3], 0
      %s17 = scalar_lea.hbm %s0, %s14
      %s19 = sshll.u32 %s17, 4
      %s20 = int_to_ptr.hbm [resolvable:$true] %s19
      %s21 = sshll.u32 [#allocation2], 4
      %s22 = int_to_ptr.vmem [resolvable:$true] %s21
      %24 = dma.hbm_to_vmem [thread:$0]  %s20, 16, %s22, [#allocation3]
    $region5: #{tpu_custom_call.1} parent=1 // pred_fallthru
      _
    // Predicated region
    $region6: #{tpu_custom_call.1} parent=1 // pred_check
      _
    $region7: #{tpu_custom_call.1} parent=1 // pred_check_branch
      %26 = sbr.rel (0) target = $region9
    $region8: #{tpu_custom_call.1} parent=1 // pred_region
      %s27 = sadd.s32 0, 0
      %p28 = scmp.lt.s32.totalorder %s27, 0
      %s29 = scalar_select %p28, %s27, 0
      %31 = vsyncadd [#allocation6], 0
      %s32 = scalar_lea.hbm %s1, %s29
      %s34 = sshll.u32 %s32, 4
      %s35 = int_to_ptr.hbm [resolvable:$true] %s34
      %s36 = sshll.u32 [#allocation5], 4
      %s37 = int_to_ptr.vmem [resolvable:$true] %s36
      %39 = dma.hbm_to_vmem [thread:$0]  %s35, 16, %s37, [#allocation6]
    $region9: #{tpu_custom_call.1} parent=1 // pred_fallthru
      _
    // Predicated region
    $region10: #{tpu_custom_call.1} parent=1 // pred_check
      _
    $region11: #{tpu_custom_call.1} parent=1 // pred_check_branch
      %41 = sbr.rel (0) target = $region13
    $region12: #{tpu_custom_call.1} parent=1 // pred_region
      %43 = dma.done [#allocation3], 16
    $region13: #{tpu_custom_call.1} parent=1 // pred_fallthru
      _
    // Predicated region
    $region14: #{tpu_custom_call.1} parent=1 // pred_check
      _
    $region15: #{tpu_custom_call.1} parent=1 // pred_check_branch
      %45 = sbr.rel (0) target = $region17
    $region16: #{tpu_custom_call.1} parent=1 // pred_region
      %47 = dma.done [#allocation6], 16
    $region17: #{tpu_custom_call.1} parent=1 // pred_fallthru
      _
    %s48 = sadd.s32 0, 0
    %p49 = scmp.lt.s32.totalorder %s48, 0
    %s50 = scalar_select %p49, %s48, 0
    %s51 = sadd.s32 0, 0
    %p52 = scmp.lt.s32.totalorder %s51, 0
    %s53 = scalar_select %p52, %s51, 0
    %p54 = scmp.eq.s32.totalorder 0, 0
    // Predicated region
    $region18: #{tpu_custom_call.1} parent=1 // pred_check
      %p55 = pneg %p54
    $region19: #{tpu_custom_call.1} parent=1 // pred_check_branch
      %57 = sbr.rel (%p55) target = $region21
    $region20: #{tpu_custom_call.1} parent=1 // pred_region
      %58 = vst [vmem:[#allocation7] sm:$0xff] 0.0
    $region21: #{tpu_custom_call.1} parent=1 // pred_fallthru
      _
    %v59 = vld [vmem:[#allocation2] sm:$0x1]
    %v60 = vld [vmem:[#allocation5] sm:$0x1]
    %v61 = vlog2.pop %v59
    %v62 = vmul.f32 %v61, 0.6931472
    %v63 = vmax.f32 %v62, -100.0
    %v64 = vsub.f32 0.0, %v59
    %v65 = vadd.f32 %v64, 1.0
    %v66 = vlog2.pop %v65
    %v67 = vmul.f32 %v66, 0.6931472
    %v68 = vmul.f32 -0.5, %v64
    %v69 = vadd.f32 %v68, 1.0
    %v70 = vmul.f32 %v69, %v64
    %v71 = vand.u32 2147483647, %v64
    %vm72 = vcmp.lt.f32.partialorder %v71, 0.0004427343
    %v73 = vsel %vm72, %v70, %v67
    %v74 = vmax.f32 %v73, -100.0
    %v75 = vmul.f32 %v60, %v63
    %v76 = vsub.f32 1.0, %v60
    %v77 = vmul.f32 %v76, %v74
    %v78 = vadd.f32 %v75, %v77
    %v79 = vsub.f32 0.0, %v78
    %v80 = vld [vmem:[#allocation7] sm:$0x1]
    %v81 = vadd.f32 %v79, 0.0
    %v82 = vadd.f32 %v80, %v81
    %83 = vst [vmem:[#allocation7] sm:$0x1] %v82
    // Predicated region
    $region22: #{tpu_custom_call.1} parent=1 // pred_check
      _
    $region23: #{tpu_custom_call.1} parent=1 // pred_check_branch
      %85 = sbr.rel (0) target = $region25
    $region24: #{tpu_custom_call.1} parent=1 // pred_region
      %87 = vsyncadd [#allocation4], 0
      %s89 = sshll.u32 [#allocation7], 4
      %s90 = int_to_ptr.vmem [resolvable:$true] %s89
      %s91 = sshll.u32 %s2, 4
      %s92 = int_to_ptr.hbm [resolvable:$true] %s91
      %94 = dma.vmem_to_hbm [thread:$0]  %s90, 128, %s92, [#allocation4]
    $region25: #{tpu_custom_call.1} parent=1 // pred_fallthru
      _
    // Predicated region
    $region26: #{tpu_custom_call.1} parent=1 // pred_check
      _
    $region27: #{tpu_custom_call.1} parent=1 // pred_check_branch
      %96 = sbr.rel (0) target = $region29
    $region28: #{tpu_custom_call.1} parent=1 // pred_region
      %98 = dma.done [#allocation4], 128
    $region29: #{tpu_custom_call.1} parent=1 // pred_fallthru
      _
    %99 = vsyncpa [#allocation3], 1
    %100 = vsyncpa [#allocation6], 1
    %101 = vsyncpa [#allocation4], 1

</llo_original>
